<compile_context>
chip_gen: v7x
topology: tpu7x:2x2x1
jax: 0.10.0
libtpu: 0.0.40
codegen_flags: <defaults>
</compile_context>

<pallas_src>
import functools
import math

import jax
import jax.numpy as jnp
from jax.experimental import pallas as pl
from jax.experimental.pallas import tpu as pltpu


def _round_up(x, m):
    return ((x + m - 1) // m) * m


# ---------------------------------------------------------------------------
# Kernel: gather TM CLS embedding rows from HBM -> VMEM, then
#         out = GELU(cls @ W + b) for one (TM, TN) output tile.
# ---------------------------------------------------------------------------
def _cls_fc_gelu_kernel(ids_ref,      # SMEM [B_pad] int32 (scalar prefetch)
                        emb_hbm,      # ANY  [V, Dw]       (HBM, manual DMA)
                        w_ref,        # VMEM [Dw, TN] bf16
                        b_ref,        # VMEM [1,  TN] f32
                        out_ref,      # VMEM [TM, TN] f32
                        cls_vmem,     # scratch VMEM [TM, Dw] (table dtype)
                        sems,         # scratch DMA sems (TM,)
                        *, tm):
    i = pl.program_id(0)              # batch tile
    j = pl.program_id(1)              # output-feature tile

    # Gather the TM CLS rows for this batch tile once (scratch persists over j).
    @pl.when(j == 0)
    def _gather():
        copies = []
        for r in range(tm):                      # static unrolled row gather
            row = ids_ref[i * tm + r]
            cp = pltpu.make_async_copy(
                emb_hbm.at[pl.ds(row, 1), :],
                cls_vmem.at[pl.ds(r, 1), :],
                sems.at[r],
            )
            cp.start()
            copies.append(cp)
        for cp in copies:                        # overlap: issue all, then wait
            cp.wait()

    x = cls_vmem[...].astype(jnp.bfloat16)       # bf16 MXU operand
    y = jnp.dot(x, w_ref[...], preferred_element_type=jnp.float32)
    y = y + b_ref[...]                           # fused bias in the VPU epilogue
    inv_sqrt2 = jnp.float32(1.0 / math.sqrt(2.0))
    # Exact GELU (PyTorch nn.GELU(approximate='none')).
    out_ref[...] = 0.5 * y * (1.0 + jax.lax.erf(y * inv_sqrt2))


def cls_embed_fc_gelu_pallas(cls_ids, emb_table, w_t_pad, b_pad, *, tm=128, tn=128):
    """cls_ids [B] i32, emb_table [V,Dw] f32, w_t_pad [Dw,Di_pad] bf16,
    b_pad [1,Di_pad] f32  ->  [B_pad, Di_pad] f32 (caller slices)."""
    B = cls_ids.shape[0]
    _, Dw = emb_table.shape
    Di_pad = w_t_pad.shape[1]
    assert Di_pad % tn == 0

    # Pad / clamp the batch tile: multiple of 8 sublanes, no bigger than needed.
    tm = _round_up(max(8, min(tm, _round_up(B, 8))), 8)
    B_pad = _round_up(B, tm)
    nb, nn = B_pad // tm, Di_pad // tn

    ids_pad = jnp.zeros((B_pad,), jnp.int32).at[:B].set(cls_ids.astype(jnp.int32))

    kernel = functools.partial(_cls_fc_gelu_kernel, tm=tm)

    grid_spec = pltpu.PrefetchScalarGridSpec(
        num_scalar_prefetch=1,
        grid=(nb, nn),
        in_specs=[
            pl.BlockSpec(memory_space=pl.ANY),                      # emb table (HBM)
            pl.BlockSpec((Dw, tn), lambda i, j, ids: (0, j)),       # W^T tile (bf16)
            pl.BlockSpec((1, tn), lambda i, j, ids: (0, j)),        # bias tile
        ],
        out_specs=pl.BlockSpec((tm, tn), lambda i, j, ids: (i, j)),
        scratch_shapes=[
            pltpu.VMEM((tm, Dw), emb_table.dtype),
            pltpu.SemaphoreType.DMA((tm,)),
        ],
    )

    return pl.pallas_call(
        kernel,
        out_shape=jax.ShapeDtypeStruct((B_pad, Di_pad), jnp.float32),
        grid_spec=grid_spec,
        compiler_params=pltpu.CompilerParams(
            dimension_semantics=("parallel", "arbitrary")),
    )(ids_pad, emb_table, w_t_pad, b_pad)


# ---------------------------------------------------------------------------
# Text_Encoder: split text into (ids, attention_mask), "bert" stub CLS,
# fc + GELU — everything past the split runs inside the Pallas kernel.
# ---------------------------------------------------------------------------
class TextEncoderPallas:
    def __init__(self, key, vocab_size, item_embedding_dim, word_embedding_dim,
                 *, tm=128, tn=128):
        self.item_dim = item_embedding_dim
        self.word_dim = word_embedding_dim
        self.tm, self.tn = tm, tn

        k_emb, k_w, k_b = jax.random.split(key, 3)
        # Deterministic synthetic "bert_model" parameters (embedding table only).
        self.emb_table = 0.02 * jax.random.normal(
            k_emb, (vocab_size, word_embedding_dim), jnp.float32)

        # nn.Linear(word_embedding_dim, item_embedding_dim)-style init.
        bound = 1.0 / math.sqrt(word_embedding_dim)
        fc_w = jax.random.uniform(
            k_w, (item_embedding_dim, word_embedding_dim), jnp.float32, -bound, bound)
        fc_b = jax.random.uniform(
            k_b, (item_embedding_dim,), jnp.float32, -bound, bound)

        # Transpose + lane-pad the weight ONCE at init; store bf16 for the MXU.
        di_pad = _round_up(item_embedding_dim, tn)
        w_t = jnp.zeros((word_embedding_dim, di_pad), jnp.float32)
        w_t = w_t.at[:, :item_embedding_dim].set(fc_w.T)
        self.fc_w_t_pad = w_t.astype(jnp.bfloat16)          # [Dw, Di_pad] bf16
        self.fc_b_pad = jnp.zeros((1, di_pad), jnp.float32).at[
            0, :item_embedding_dim].set(fc_b)                # [1, Di_pad] f32

    def __call__(self, text):
        B, two_L = text.shape
        L = two_L // 2
        text_ids = text[:, :L]          # torch.narrow(text, 1, 0, L)
        _text_attmask = text[:, L:]     # torch.narrow(text, 1, L, L) (stub ignores it)
        cls_ids = text_ids[:, 0]        # stub's CLS state depends only on ids[:, 0]
        out_pad = cls_embed_fc_gelu_pallas(
            cls_ids, self.emb_table, self.fc_w_t_pad, self.fc_b_pad,
            tm=self.tm, tn=self.tn)
        return out_pad[:B, :self.item_dim]


if __name__ == "__main__":
    key = jax.random.PRNGKey(0)
    k_params, k_ids = jax.random.split(key)

    B = 2                 # batch
    L = 8                 # num_words (seq length of ids / of mask)
    VOCAB = 50
    WORD_DIM = 32         # word_embedding_dim
    ITEM_DIM = 16         # item_embedding_dim

    model = TextEncoderPallas(k_params, VOCAB, ITEM_DIM, WORD_DIM)

    ids = jax.random.randint(k_ids, (B, L), 0, VOCAB, dtype=jnp.int32)
    attmask = jnp.ones((B, L), dtype=jnp.int32)
    text = jnp.concatenate([ids, attmask], axis=1)   # [B, 2*L]

    out = jax.block_until_ready(model(text))
    assert out.shape == (B, ITEM_DIM), out.shape

    # Reference in plain JAX (same bf16 rounding of matmul operands as the kernel).
    cls_ref = model.emb_table[ids[:, 0]]                              # [B, Dw] f32
    x_bf = cls_ref.astype(jnp.bfloat16).astype(jnp.float32)
    w_f = model.fc_w_t_pad[:, :ITEM_DIM].astype(jnp.float32)
    b_f = model.fc_b_pad[:, :ITEM_DIM]
    y_ref = jnp.dot(x_bf, w_f, precision=jax.lax.Precision.HIGHEST) + b_f
    ref = 0.5 * y_ref * (1.0 + jax.lax.erf(y_ref / jnp.sqrt(2.0)))
    assert jnp.allclose(out, ref, atol=2e-4, rtol=2e-4), float(jnp.max(jnp.abs(out - ref)))

    print("KERNEL_OK")
</pallas_src>

<mosaic_0001>
module attributes {stable_mosaic.version = 11 : i64} {
  func.func @_cls_fc_gelu_kernel(%arg0: i32, %arg1: i32, %arg2: memref<8xi32, #tpu.memory_space<smem>>, %arg3: memref<50x32xf32, #tpu.memory_space<any>>, %arg4: memref<32x128xbf16, #tpu.memory_space<vmem>>, %arg5: memref<1x128xf32, #tpu.memory_space<vmem>>, %arg6: memref<8x128xf32, #tpu.memory_space<vmem>>, %arg7: memref<8x32xf32, #tpu.memory_space<vmem>>, %arg8: memref<8x!tpu.dma_semaphore, #tpu.memory_space<semaphore_mem>>) attributes {dimension_semantics = [#tpu.dimension_semantics<parallel>, #tpu.dimension_semantics<arbitrary>], iteration_bounds = array<i64: 1, 1>, scalar_prefetch = 1 : i64, scratch_operands = 2 : i64, tpu.core_type = #tpu.core_type<tc>, window_params = [{}, {transform_indices = @transform_1, window_bounds = array<i64: 32, 128>}, {transform_indices = @transform_2, window_bounds = array<i64: 1, 128>}, {transform_indices = @transform_3, window_bounds = array<i64: 8, 128>}]} {
    %c0_i32 = arith.constant 0 : i32
    %0 = arith.cmpi eq, %arg1, %c0_i32 : i32
    %1 = arith.extui %0 : i1 to i32
    %c0_i32_0 = arith.constant 0 : i32
    %2 = arith.cmpi ne, %1, %c0_i32_0 : i32
    scf.if %2 {
      %c8_i32 = arith.constant 8 : i32
      %19 = arith.muli %arg0, %c8_i32 : i32
      %c0_i32_11 = arith.constant 0 : i32
      %20 = arith.addi %19, %c0_i32_11 : i32
      %21 = arith.index_cast %20 : i32 to index
      %22 = memref.load %arg2[%21] : memref<8xi32, #tpu.memory_space<smem>>
      %c0_i32_12 = arith.constant 0 : i32
      %c0_i32_13 = arith.constant 0 : i32
      %23 = tpu.memref_slice %arg3[%22, %c0_i32_13] : memref<50x32xf32, #tpu.memory_space<any>> -> memref<1x32xf32, #tpu.memory_space<any>>
      %c0_i32_14 = arith.constant 0 : i32
      %c0_i32_15 = arith.constant 0 : i32
      %24 = tpu.memref_slice %arg7[%c0_i32_14, %c0_i32_15] : memref<8x32xf32, #tpu.memory_space<vmem>> -> memref<1x32xf32, #tpu.memory_space<vmem>>
      %25 = tpu.memref_slice %arg8[%c0_i32_12] : memref<8x!tpu.dma_semaphore, #tpu.memory_space<semaphore_mem>> -> memref<1x!tpu.dma_semaphore, #tpu.memory_space<semaphore_mem>>
      %26 = tpu.memref_squeeze %25 : memref<1x!tpu.dma_semaphore, #tpu.memory_space<semaphore_mem>> -> memref<!tpu.dma_semaphore, #tpu.memory_space<semaphore_mem>>
      tpu.enqueue_dma source(%23 : memref<1x32xf32, #tpu.memory_space<any>>) target(%24 : memref<1x32xf32, #tpu.memory_space<vmem>>) target_semaphore(%26 : memref<!tpu.dma_semaphore, #tpu.memory_space<semaphore_mem>>)
      %c8_i32_16 = arith.constant 8 : i32
      %27 = arith.muli %arg0, %c8_i32_16 : i32
      %c1_i32 = arith.constant 1 : i32
      %28 = arith.addi %27, %c1_i32 : i32
      %29 = arith.index_cast %28 : i32 to index
      %30 = memref.load %arg2[%29] : memref<8xi32, #tpu.memory_space<smem>>
      %c1_i32_17 = arith.constant 1 : i32
      %c0_i32_18 = arith.constant 0 : i32
      %31 = tpu.memref_slice %arg3[%30, %c0_i32_18] : memref<50x32xf32, #tpu.memory_space<any>> -> memref<1x32xf32, #tpu.memory_space<any>>
      %c1_i32_19 = arith.constant 1 : i32
      %c0_i32_20 = arith.constant 0 : i32
      %32 = tpu.memref_slice %arg7[%c1_i32_19, %c0_i32_20] : memref<8x32xf32, #tpu.memory_space<vmem>> -> memref<1x32xf32, #tpu.memory_space<vmem>>
      %33 = tpu.memref_slice %arg8[%c1_i32_17] : memref<8x!tpu.dma_semaphore, #tpu.memory_space<semaphore_mem>> -> memref<1x!tpu.dma_semaphore, #tpu.memory_space<semaphore_mem>>
      %34 = tpu.memref_squeeze %33 : memref<1x!tpu.dma_semaphore, #tpu.memory_space<semaphore_mem>> -> memref<!tpu.dma_semaphore, #tpu.memory_space<semaphore_mem>>
      tpu.enqueue_dma source(%31 : memref<1x32xf32, #tpu.memory_space<any>>) target(%32 : memref<1x32xf32, #tpu.memory_space<vmem>>) target_semaphore(%34 : memref<!tpu.dma_semaphore, #tpu.memory_space<semaphore_mem>>)
      %c8_i32_21 = arith.constant 8 : i32
      %35 = arith.muli %arg0, %c8_i32_21 : i32
      %c2_i32 = arith.constant 2 : i32
      %36 = arith.addi %35, %c2_i32 : i32
      %37 = arith.index_cast %36 : i32 to index
      %38 = memref.load %arg2[%37] : memref<8xi32, #tpu.memory_space<smem>>
      %c2_i32_22 = arith.constant 2 : i32
      %c0_i32_23 = arith.constant 0 : i32
      %39 = tpu.memref_slice %arg3[%38, %c0_i32_23] : memref<50x32xf32, #tpu.memory_space<any>> -> memref<1x32xf32, #tpu.memory_space<any>>
      %c2_i32_24 = arith.constant 2 : i32
      %c0_i32_25 = arith.constant 0 : i32
      %40 = tpu.memref_slice %arg7[%c2_i32_24, %c0_i32_25] : memref<8x32xf32, #tpu.memory_space<vmem>> -> memref<1x32xf32, #tpu.memory_space<vmem>>
      %41 = tpu.memref_slice %arg8[%c2_i32_22] : memref<8x!tpu.dma_semaphore, #tpu.memory_space<semaphore_mem>> -> memref<1x!tpu.dma_semaphore, #tpu.memory_space<semaphore_mem>>
      %42 = tpu.memref_squeeze %41 : memref<1x!tpu.dma_semaphore, #tpu.memory_space<semaphore_mem>> -> memref<!tpu.dma_semaphore, #tpu.memory_space<semaphore_mem>>
      tpu.enqueue_dma source(%39 : memref<1x32xf32, #tpu.memory_space<any>>) target(%40 : memref<1x32xf32, #tpu.memory_space<vmem>>) target_semaphore(%42 : memref<!tpu.dma_semaphore, #tpu.memory_space<semaphore_mem>>)
      %c8_i32_26 = arith.constant 8 : i32
      %43 = arith.muli %arg0, %c8_i32_26 : i32
      %c3_i32 = arith.constant 3 : i32
      %44 = arith.addi %43, %c3_i32 : i32
      %45 = arith.index_cast %44 : i32 to index
      %46 = memref.load %arg2[%45] : memref<8xi32, #tpu.memory_space<smem>>
      %c3_i32_27 = arith.constant 3 : i32
      %c0_i32_28 = arith.constant 0 : i32
      %47 = tpu.memref_slice %arg3[%46, %c0_i32_28] : memref<50x32xf32, #tpu.memory_space<any>> -> memref<1x32xf32, #tpu.memory_space<any>>
      %c3_i32_29 = arith.constant 3 : i32
      %c0_i32_30 = arith.constant 0 : i32
      %48 = tpu.memref_slice %arg7[%c3_i32_29, %c0_i32_30] : memref<8x32xf32, #tpu.memory_space<vmem>> -> memref<1x32xf32, #tpu.memory_space<vmem>>
      %49 = tpu.memref_slice %arg8[%c3_i32_27] : memref<8x!tpu.dma_semaphore, #tpu.memory_space<semaphore_mem>> -> memref<1x!tpu.dma_semaphore, #tpu.memory_space<semaphore_mem>>
      %50 = tpu.memref_squeeze %49 : memref<1x!tpu.dma_semaphore, #tpu.memory_space<semaphore_mem>> -> memref<!tpu.dma_semaphore, #tpu.memory_space<semaphore_mem>>
      tpu.enqueue_dma source(%47 : memref<1x32xf32, #tpu.memory_space<any>>) target(%48 : memref<1x32xf32, #tpu.memory_space<vmem>>) target_semaphore(%50 : memref<!tpu.dma_semaphore, #tpu.memory_space<semaphore_mem>>)
      %c8_i32_31 = arith.constant 8 : i32
      %51 = arith.muli %arg0, %c8_i32_31 : i32
      %c4_i32 = arith.constant 4 : i32
      %52 = arith.addi %51, %c4_i32 : i32
      %53 = arith.index_cast %52 : i32 to index
      %54 = memref.load %arg2[%53] : memref<8xi32, #tpu.memory_space<smem>>
      %c4_i32_32 = arith.constant 4 : i32
      %c0_i32_33 = arith.constant 0 : i32
      %55 = tpu.memref_slice %arg3[%54, %c0_i32_33] : memref<50x32xf32, #tpu.memory_space<any>> -> memref<1x32xf32, #tpu.memory_space<any>>
      %c4_i32_34 = arith.constant 4 : i32
      %c0_i32_35 = arith.constant 0 : i32
      %56 = tpu.memref_slice %arg7[%c4_i32_34, %c0_i32_35] : memref<8x32xf32, #tpu.memory_space<vmem>> -> memref<1x32xf32, #tpu.memory_space<vmem>>
      %57 = tpu.memref_slice %arg8[%c4_i32_32] : memref<8x!tpu.dma_semaphore, #tpu.memory_space<semaphore_mem>> -> memref<1x!tpu.dma_semaphore, #tpu.memory_space<semaphore_mem>>
      %58 = tpu.memref_squeeze %57 : memref<1x!tpu.dma_semaphore, #tpu.memory_space<semaphore_mem>> -> memref<!tpu.dma_semaphore, #tpu.memory_space<semaphore_mem>>
      tpu.enqueue_dma source(%55 : memref<1x32xf32, #tpu.memory_space<any>>) target(%56 : memref<1x32xf32, #tpu.memory_space<vmem>>) target_semaphore(%58 : memref<!tpu.dma_semaphore, #tpu.memory_space<semaphore_mem>>)
      %c8_i32_36 = arith.constant 8 : i32
      %59 = arith.muli %arg0, %c8_i32_36 : i32
      %c5_i32 = arith.constant 5 : i32
      %60 = arith.addi %59, %c5_i32 : i32
      %61 = arith.index_cast %60 : i32 to index
      %62 = memref.load %arg2[%61] : memref<8xi32, #tpu.memory_space<smem>>
      %c5_i32_37 = arith.constant 5 : i32
      %c0_i32_38 = arith.constant 0 : i32
      %63 = tpu.memref_slice %arg3[%62, %c0_i32_38] : memref<50x32xf32, #tpu.memory_space<any>> -> memref<1x32xf32, #tpu.memory_space<any>>
      %c5_i32_39 = arith.constant 5 : i32
      %c0_i32_40 = arith.constant 0 : i32
      %64 = tpu.memref_slice %arg7[%c5_i32_39, %c0_i32_40] : memref<8x32xf32, #tpu.memory_space<vmem>> -> memref<1x32xf32, #tpu.memory_space<vmem>>
      %65 = tpu.memref_slice %arg8[%c5_i32_37] : memref<8x!tpu.dma_semaphore, #tpu.memory_space<semaphore_mem>> -> memref<1x!tpu.dma_semaphore, #tpu.memory_space<semaphore_mem>>
      %66 = tpu.memref_squeeze %65 : memref<1x!tpu.dma_semaphore, #tpu.memory_space<semaphore_mem>> -> memref<!tpu.dma_semaphore, #tpu.memory_space<semaphore_mem>>
      tpu.enqueue_dma source(%63 : memref<1x32xf32, #tpu.memory_space<any>>) target(%64 : memref<1x32xf32, #tpu.memory_space<vmem>>) target_semaphore(%66 : memref<!tpu.dma_semaphore, #tpu.memory_space<semaphore_mem>>)
      %c8_i32_41 = arith.constant 8 : i32
      %67 = arith.muli %arg0, %c8_i32_41 : i32
      %c6_i32 = arith.constant 6 : i32
      %68 = arith.addi %67, %c6_i32 : i32
      %69 = arith.index_cast %68 : i32 to index
      %70 = memref.load %arg2[%69] : memref<8xi32, #tpu.memory_space<smem>>
      %c6_i32_42 = arith.constant 6 : i32
      %c0_i32_43 = arith.constant 0 : i32
      %71 = tpu.memref_slice %arg3[%70, %c0_i32_43] : memref<50x32xf32, #tpu.memory_space<any>> -> memref<1x32xf32, #tpu.memory_space<any>>
      %c6_i32_44 = arith.constant 6 : i32
      %c0_i32_45 = arith.constant 0 : i32
      %72 = tpu.memref_slice %arg7[%c6_i32_44, %c0_i32_45] : memref<8x32xf32, #tpu.memory_space<vmem>> -> memref<1x32xf32, #tpu.memory_space<vmem>>
      %73 = tpu.memref_slice %arg8[%c6_i32_42] : memref<8x!tpu.dma_semaphore, #tpu.memory_space<semaphore_mem>> -> memref<1x!tpu.dma_semaphore, #tpu.memory_space<semaphore_mem>>
      %74 = tpu.memref_squeeze %73 : memref<1x!tpu.dma_semaphore, #tpu.memory_space<semaphore_mem>> -> memref<!tpu.dma_semaphore, #tpu.memory_space<semaphore_mem>>
      tpu.enqueue_dma source(%71 : memref<1x32xf32, #tpu.memory_space<any>>) target(%72 : memref<1x32xf32, #tpu.memory_space<vmem>>) target_semaphore(%74 : memref<!tpu.dma_semaphore, #tpu.memory_space<semaphore_mem>>)
      %c8_i32_46 = arith.constant 8 : i32
      %75 = arith.muli %arg0, %c8_i32_46 : i32
      %c7_i32 = arith.constant 7 : i32
      %76 = arith.addi %75, %c7_i32 : i32
      %77 = arith.index_cast %76 : i32 to index
      %78 = memref.load %arg2[%77] : memref<8xi32, #tpu.memory_space<smem>>
      %c7_i32_47 = arith.constant 7 : i32
      %c0_i32_48 = arith.constant 0 : i32
      %79 = tpu.memref_slice %arg3[%78, %c0_i32_48] : memref<50x32xf32, #tpu.memory_space<any>> -> memref<1x32xf32, #tpu.memory_space<any>>
      %c7_i32_49 = arith.constant 7 : i32
      %c0_i32_50 = arith.constant 0 : i32
      %80 = tpu.memref_slice %arg7[%c7_i32_49, %c0_i32_50] : memref<8x32xf32, #tpu.memory_space<vmem>> -> memref<1x32xf32, #tpu.memory_space<vmem>>
      %81 = tpu.memref_slice %arg8[%c7_i32_47] : memref<8x!tpu.dma_semaphore, #tpu.memory_space<semaphore_mem>> -> memref<1x!tpu.dma_semaphore, #tpu.memory_space<semaphore_mem>>
      %82 = tpu.memref_squeeze %81 : memref<1x!tpu.dma_semaphore, #tpu.memory_space<semaphore_mem>> -> memref<!tpu.dma_semaphore, #tpu.memory_space<semaphore_mem>>
      tpu.enqueue_dma source(%79 : memref<1x32xf32, #tpu.memory_space<any>>) target(%80 : memref<1x32xf32, #tpu.memory_space<vmem>>) target_semaphore(%82 : memref<!tpu.dma_semaphore, #tpu.memory_space<semaphore_mem>>)
      %c0_i32_51 = arith.constant 0 : i32
      %c0_i32_52 = arith.constant 0 : i32
      %83 = tpu.memref_slice %arg3[%22, %c0_i32_52] : memref<50x32xf32, #tpu.memory_space<any>> -> memref<1x32xf32, #tpu.memory_space<any>>
      %c0_i32_53 = arith.constant 0 : i32
      %c0_i32_54 = arith.constant 0 : i32
      %84 = tpu.memref_slice %arg7[%c0_i32_53, %c0_i32_54] : memref<8x32xf32, #tpu.memory_space<vmem>> -> memref<1x32xf32, #tpu.memory_space<vmem>>
      %85 = tpu.memref_slice %arg8[%c0_i32_51] : memref<8x!tpu.dma_semaphore, #tpu.memory_space<semaphore_mem>> -> memref<1x!tpu.dma_semaphore, #tpu.memory_space<semaphore_mem>>
      %86 = tpu.memref_squeeze %85 : memref<1x!tpu.dma_semaphore, #tpu.memory_space<semaphore_mem>> -> memref<!tpu.dma_semaphore, #tpu.memory_space<semaphore_mem>>
      tpu.wait_dma2 semaphore(%86 : memref<!tpu.dma_semaphore, #tpu.memory_space<semaphore_mem>>) src(%83 : memref<1x32xf32, #tpu.memory_space<any>>) dst(%84 : memref<1x32xf32, #tpu.memory_space<vmem>>)
      %c1_i32_55 = arith.constant 1 : i32
      %c0_i32_56 = arith.constant 0 : i32
      %87 = tpu.memref_slice %arg3[%30, %c0_i32_56] : memref<50x32xf32, #tpu.memory_space<any>> -> memref<1x32xf32, #tpu.memory_space<any>>
      %c1_i32_57 = arith.constant 1 : i32
      %c0_i32_58 = arith.constant 0 : i32
      %88 = tpu.memref_slice %arg7[%c1_i32_57, %c0_i32_58] : memref<8x32xf32, #tpu.memory_space<vmem>> -> memref<1x32xf32, #tpu.memory_space<vmem>>
      %89 = tpu.memref_slice %arg8[%c1_i32_55] : memref<8x!tpu.dma_semaphore, #tpu.memory_space<semaphore_mem>> -> memref<1x!tpu.dma_semaphore, #tpu.memory_space<semaphore_mem>>
      %90 = tpu.memref_squeeze %89 : memref<1x!tpu.dma_semaphore, #tpu.memory_space<semaphore_mem>> -> memref<!tpu.dma_semaphore, #tpu.memory_space<semaphore_mem>>
      tpu.wait_dma2 semaphore(%90 : memref<!tpu.dma_semaphore, #tpu.memory_space<semaphore_mem>>) src(%87 : memref<1x32xf32, #tpu.memory_space<any>>) dst(%88 : memref<1x32xf32, #tpu.memory_space<vmem>>)
      %c2_i32_59 = arith.constant 2 : i32
      %c0_i32_60 = arith.constant 0 : i32
      %91 = tpu.memref_slice %arg3[%38, %c0_i32_60] : memref<50x32xf32, #tpu.memory_space<any>> -> memref<1x32xf32, #tpu.memory_space<any>>
      %c2_i32_61 = arith.constant 2 : i32
      %c0_i32_62 = arith.constant 0 : i32
      %92 = tpu.memref_slice %arg7[%c2_i32_61, %c0_i32_62] : memref<8x32xf32, #tpu.memory_space<vmem>> -> memref<1x32xf32, #tpu.memory_space<vmem>>
      %93 = tpu.memref_slice %arg8[%c2_i32_59] : memref<8x!tpu.dma_semaphore, #tpu.memory_space<semaphore_mem>> -> memref<1x!tpu.dma_semaphore, #tpu.memory_space<semaphore_mem>>
      %94 = tpu.memref_squeeze %93 : memref<1x!tpu.dma_semaphore, #tpu.memory_space<semaphore_mem>> -> memref<!tpu.dma_semaphore, #tpu.memory_space<semaphore_mem>>
      tpu.wait_dma2 semaphore(%94 : memref<!tpu.dma_semaphore, #tpu.memory_space<semaphore_mem>>) src(%91 : memref<1x32xf32, #tpu.memory_space<any>>) dst(%92 : memref<1x32xf32, #tpu.memory_space<vmem>>)
      %c3_i32_63 = arith.constant 3 : i32
      %c0_i32_64 = arith.constant 0 : i32
      %95 = tpu.memref_slice %arg3[%46, %c0_i32_64] : memref<50x32xf32, #tpu.memory_space<any>> -> memref<1x32xf32, #tpu.memory_space<any>>
      %c3_i32_65 = arith.constant 3 : i32
      %c0_i32_66 = arith.constant 0 : i32
      %96 = tpu.memref_slice %arg7[%c3_i32_65, %c0_i32_66] : memref<8x32xf32, #tpu.memory_space<vmem>> -> memref<1x32xf32, #tpu.memory_space<vmem>>
      %97 = tpu.memref_slice %arg8[%c3_i32_63] : memref<8x!tpu.dma_semaphore, #tpu.memory_space<semaphore_mem>> -> memref<1x!tpu.dma_semaphore, #tpu.memory_space<semaphore_mem>>
      %98 = tpu.memref_squeeze %97 : memref<1x!tpu.dma_semaphore, #tpu.memory_space<semaphore_mem>> -> memref<!tpu.dma_semaphore, #tpu.memory_space<semaphore_mem>>
      tpu.wait_dma2 semaphore(%98 : memref<!tpu.dma_semaphore, #tpu.memory_space<semaphore_mem>>) src(%95 : memref<1x32xf32, #tpu.memory_space<any>>) dst(%96 : memref<1x32xf32, #tpu.memory_space<vmem>>)
      %c4_i32_67 = arith.constant 4 : i32
      %c0_i32_68 = arith.constant 0 : i32
      %99 = tpu.memref_slice %arg3[%54, %c0_i32_68] : memref<50x32xf32, #tpu.memory_space<any>> -> memref<1x32xf32, #tpu.memory_space<any>>
      %c4_i32_69 = arith.constant 4 : i32
      %c0_i32_70 = arith.constant 0 : i32
      %100 = tpu.memref_slice %arg7[%c4_i32_69, %c0_i32_70] : memref<8x32xf32, #tpu.memory_space<vmem>> -> memref<1x32xf32, #tpu.memory_space<vmem>>
      %101 = tpu.memref_slice %arg8[%c4_i32_67] : memref<8x!tpu.dma_semaphore, #tpu.memory_space<semaphore_mem>> -> memref<1x!tpu.dma_semaphore, #tpu.memory_space<semaphore_mem>>
      %102 = tpu.memref_squeeze %101 : memref<1x!tpu.dma_semaphore, #tpu.memory_space<semaphore_mem>> -> memref<!tpu.dma_semaphore, #tpu.memory_space<semaphore_mem>>
      tpu.wait_dma2 semaphore(%102 : memref<!tpu.dma_semaphore, #tpu.memory_space<semaphore_mem>>) src(%99 : memref<1x32xf32, #tpu.memory_space<any>>) dst(%100 : memref<1x32xf32, #tpu.memory_space<vmem>>)
      %c5_i32_71 = arith.constant 5 : i32
      %c0_i32_72 = arith.constant 0 : i32
      %103 = tpu.memref_slice %arg3[%62, %c0_i32_72] : memref<50x32xf32, #tpu.memory_space<any>> -> memref<1x32xf32, #tpu.memory_space<any>>
      %c5_i32_73 = arith.constant 5 : i32
      %c0_i32_74 = arith.constant 0 : i32
      %104 = tpu.memref_slice %arg7[%c5_i32_73, %c0_i32_74] : memref<8x32xf32, #tpu.memory_space<vmem>> -> memref<1x32xf32, #tpu.memory_space<vmem>>
      %105 = tpu.memref_slice %arg8[%c5_i32_71] : memref<8x!tpu.dma_semaphore, #tpu.memory_space<semaphore_mem>> -> memref<1x!tpu.dma_semaphore, #tpu.memory_space<semaphore_mem>>
      %106 = tpu.memref_squeeze %105 : memref<1x!tpu.dma_semaphore, #tpu.memory_space<semaphore_mem>> -> memref<!tpu.dma_semaphore, #tpu.memory_space<semaphore_mem>>
      tpu.wait_dma2 semaphore(%106 : memref<!tpu.dma_semaphore, #tpu.memory_space<semaphore_mem>>) src(%103 : memref<1x32xf32, #tpu.memory_space<any>>) dst(%104 : memref<1x32xf32, #tpu.memory_space<vmem>>)
      %c6_i32_75 = arith.constant 6 : i32
      %c0_i32_76 = arith.constant 0 : i32
      %107 = tpu.memref_slice %arg3[%70, %c0_i32_76] : memref<50x32xf32, #tpu.memory_space<any>> -> memref<1x32xf32, #tpu.memory_space<any>>
      %c6_i32_77 = arith.constant 6 : i32
      %c0_i32_78 = arith.constant 0 : i32
      %108 = tpu.memref_slice %arg7[%c6_i32_77, %c0_i32_78] : memref<8x32xf32, #tpu.memory_space<vmem>> -> memref<1x32xf32, #tpu.memory_space<vmem>>
      %109 = tpu.memref_slice %arg8[%c6_i32_75] : memref<8x!tpu.dma_semaphore, #tpu.memory_space<semaphore_mem>> -> memref<1x!tpu.dma_semaphore, #tpu.memory_space<semaphore_mem>>
      %110 = tpu.memref_squeeze %109 : memref<1x!tpu.dma_semaphore, #tpu.memory_space<semaphore_mem>> -> memref<!tpu.dma_semaphore, #tpu.memory_space<semaphore_mem>>
      tpu.wait_dma2 semaphore(%110 : memref<!tpu.dma_semaphore, #tpu.memory_space<semaphore_mem>>) src(%107 : memref<1x32xf32, #tpu.memory_space<any>>) dst(%108 : memref<1x32xf32, #tpu.memory_space<vmem>>)
      %c7_i32_79 = arith.constant 7 : i32
      %c0_i32_80 = arith.constant 0 : i32
      %111 = tpu.memref_slice %arg3[%78, %c0_i32_80] : memref<50x32xf32, #tpu.memory_space<any>> -> memref<1x32xf32, #tpu.memory_space<any>>
      %c7_i32_81 = arith.constant 7 : i32
      %c0_i32_82 = arith.constant 0 : i32
      %112 = tpu.memref_slice %arg7[%c7_i32_81, %c0_i32_82] : memref<8x32xf32, #tpu.memory_space<vmem>> -> memref<1x32xf32, #tpu.memory_space<vmem>>
      %113 = tpu.memref_slice %arg8[%c7_i32_79] : memref<8x!tpu.dma_semaphore, #tpu.memory_space<semaphore_mem>> -> memref<1x!tpu.dma_semaphore, #tpu.memory_space<semaphore_mem>>
      %114 = tpu.memref_squeeze %113 : memref<1x!tpu.dma_semaphore, #tpu.memory_space<semaphore_mem>> -> memref<!tpu.dma_semaphore, #tpu.memory_space<semaphore_mem>>
      tpu.wait_dma2 semaphore(%114 : memref<!tpu.dma_semaphore, #tpu.memory_space<semaphore_mem>>) src(%111 : memref<1x32xf32, #tpu.memory_space<any>>) dst(%112 : memref<1x32xf32, #tpu.memory_space<vmem>>)
    } else {
    }
    %c0 = arith.constant 0 : index
    %c0_1 = arith.constant 0 : index
    %3 = vector.load %arg7[%c0, %c0_1] : memref<8x32xf32, #tpu.memory_space<vmem>>, vector<8x32xf32>
    %4 = arith.truncf %3 : vector<8x32xf32> to vector<8x32xbf16>
    %c0_2 = arith.constant 0 : index
    %c0_3 = arith.constant 0 : index
    %5 = vector.load %arg4[%c0_2, %c0_3] : memref<32x128xbf16, #tpu.memory_space<vmem>>, vector<32x128xbf16>
    %cst = arith.constant dense<0.000000e+00> : vector<8x128xf32>
    %6 = tpu.matmul %4, %5, %cst {dimension_numbers = #tpu.dot_dimension_numbers<[1], [0], [0], [1], [0, 0, 1, 1], [], []>} : vector<8x32xbf16>, vector<32x128xbf16>, vector<8x128xf32> -> vector<8x128xf32>
    %c0_4 = arith.constant 0 : index
    %c0_5 = arith.constant 0 : index
    %7 = vector.load %arg5[%c0_4, %c0_5] : memref<1x128xf32, #tpu.memory_space<vmem>>, vector<1x128xf32>
    %8 = vector.broadcast %7 : vector<1x128xf32> to vector<8x128xf32>
    %9 = arith.addf %6, %8 : vector<8x128xf32>
    %cst_6 = arith.constant 5.000000e-01 : f32
    %10 = vector.broadcast %cst_6 : f32 to vector<8x128xf32>
    %11 = arith.mulf %10, %9 : vector<8x128xf32>
    %cst_7 = arith.constant 0.707106769 : f32
    %12 = vector.broadcast %cst_7 : f32 to vector<8x128xf32>
    %13 = arith.mulf %9, %12 : vector<8x128xf32>
    %14 = math.erf %13 : vector<8x128xf32>
    %cst_8 = arith.constant 1.000000e+00 : f32
    %15 = vector.broadcast %cst_8 : f32 to vector<8x128xf32>
    %16 = arith.addf %15, %14 : vector<8x128xf32>
    %17 = arith.mulf %11, %16 : vector<8x128xf32>
    %c0_9 = arith.constant 0 : index
    %c0_10 = arith.constant 0 : index
    %18 = vector.load %arg6[%c0_9, %c0_10] : memref<8x128xf32, #tpu.memory_space<vmem>>, vector<8x128xf32>
    tpu.vector_store %arg6[%c0_9, %c0_10], %17 {strides = array<i32>} : memref<8x128xf32, #tpu.memory_space<vmem>>, vector<8x128xf32>,
    return
  }
  func.func @transform_1(%arg0: i32, %arg1: i32, %arg2: memref<8xi32, #tpu.memory_space<smem>>) -> (i32, i32) {
    %c0_i32 = arith.constant 0 : i32
    %c0_i32_0 = arith.constant 0 : i32
    return %c0_i32, %arg1 : i32, i32
  }
  func.func @transform_2(%arg0: i32, %arg1: i32, %arg2: memref<8xi32, #tpu.memory_space<smem>>) -> (i32, i32) {
    %c0_i32 = arith.constant 0 : i32
    %c0_i32_0 = arith.constant 0 : i32
    return %c0_i32, %arg1 : i32, i32
  }
  func.func @transform_3(%arg0: i32, %arg1: i32, %arg2: memref<8xi32, #tpu.memory_space<smem>>) -> (i32, i32) {
    %c0_i32 = arith.constant 0 : i32
    return %arg0, %arg1 : i32, i32
  }
}

</mosaic_0001>

<llo_original>
// kernel: tpu_custom_call.1
$region0: #{tpu_custom_call.1}
  #allocation0 [shape = 'u32[]', space=smem, size = 0x4, offset = 0x4, fixed_abs, tag = 'smem constant byte address 0x4 - core index']
  #allocation1 [shape = 'u32[144,128]{1,0:T(1,128)}', space=vmem, size = 0x12000, scoped, tag = 'internal scratch']
  #allocation2 [shape = 'f32[8,32]{1,0:T(8,128)}', space=vmem, size = 0x1000, scoped, tag = 'scratch operand']
  #allocation3 [shape = 's32[8]{0}', space=sflag, size = 0x20, scoped, tag = 'scratch operand']
  #allocation4 [shape = 's32[1]{0}', space=sflag, size = 0x4, scoped, tag = 'scoped memory for tpu_custom_call.1']
  #allocation5 [shape = 'u8[512]{0}', space=smem, size = 0x200, scoped, tag = 'prefetched SMEM operand 0']
  #allocation8 [shape = 's32[]', space=sflag, size = 0x4, offset = 0, fixed_abs, tag = 'sflag constant byte address 0x0 - dummy sync flag']
  #allocation9 [shape = 's32[]', space=sflag, size = 0x4, offset = 0, fixed_abs, tag = 'sflag constant byte address 0x0 - dummy sync flag']
  #allocation10 [shape = 's32[]', space=sflag, size = 0x4, offset = 0, fixed_abs, tag = 'sflag constant byte address 0x0 - dummy sync flag']
  #allocation11 [shape = 's32[]', space=sflag, size = 0x4, offset = 0, fixed_abs, tag = 'sflag constant byte address 0x0 - dummy sync flag']
  #allocation12 [shape = 's32[]', space=sflag, size = 0x4, offset = 0, fixed_abs, tag = 'sflag constant byte address 0x0 - dummy sync flag']
  #allocation13 [shape = 's32[]', space=sflag, size = 0x4, offset = 0, fixed_abs, tag = 'sflag constant byte address 0x0 - dummy sync flag']
  #allocation14 [shape = 's32[]', space=sflag, size = 0x4, offset = 0, fixed_abs, tag = 'sflag constant byte address 0x0 - dummy sync flag']
  #allocation15 [shape = 's32[]', space=sflag, size = 0x4, offset = 0, fixed_abs, tag = 'sflag constant byte address 0x0 - dummy sync flag']
  %s0 = inlined_call_operand.vmem [shape: s32[8], index: 0, kind: input, shape index: {}]
  %s1 = inlined_call_operand.vmem [shape: f32[50,32], index: 1, kind: input, shape index: {}]
  %s2 = inlined_call_operand.vmem [shape: bf16[32,128], index: 2, kind: input, shape index: {}]
  %s3 = inlined_call_operand.vmem [shape: f32[1,128], index: 3, kind: input, shape index: {}]
  %s4 = inlined_call_operand.hbm [shape: f32[8,128], index: 4, kind: output, shape index: {}]
  %s5 = sld [smem:[#allocation0]]
  $region262: #{tpu_custom_call.1} parent=0
    _
  %s7 = ssub.s32 1, %s5
  %s8 = scalar_select 0, %s7, %s5
  %s9 = sshll.u32 %s0, 4
  %s10 = int_to_ptr.vmem [resolvable:$true] %s9
  %12 = dma.vmem_to_smem %s10, 16, [#allocation5], [#allocation4]
  %13 = dma.done [#allocation4], 16
  %14 = sfence
  $region1: #{tpu_custom_call.1} parent=0
    #allocation6 [shape = 'u8[4096]{0}', space=vmem, size = 0x1000, scoped, tag = 'output window, operand 0, single buffered']
    #allocation7 [shape = 's32[1]{0}', space=sflag, size = 0x4, scoped, tag = 'scoped memory for tpu_custom_call.1']
    %15 = vsyncpa [#allocation7], 0
    // Predicated region
    $region2: #{tpu_custom_call.1} parent=1 // pred_check
      _
    $region3: #{tpu_custom_call.1} parent=1 // pred_check_branch
      %17 = sbr.rel (0) target = $region5
    $region4: #{tpu_custom_call.1} parent=1 // pred_region
      _
    $region5: #{tpu_custom_call.1} parent=1 // pred_fallthru
      _
    // Predicated region
    $region6: #{tpu_custom_call.1} parent=1 // pred_check
      _
    $region7: #{tpu_custom_call.1} parent=1 // pred_check_branch
      %19 = sbr.rel (0) target = $region9
    $region8: #{tpu_custom_call.1} parent=1 // pred_region
      _
    $region9: #{tpu_custom_call.1} parent=1 // pred_fallthru
      _
    %p21 = scmp.eq.s32.totalorder 0, 0
    // Predicated region
    $region10: #{tpu_custom_call.1} parent=1 // pred_check
      %p22 = pneg %p21
    $region11: #{tpu_custom_call.1} parent=1 // pred_check_branch
      %24 = sbr.rel (%p22) target = $region13
    $region12: #{tpu_custom_call.1} parent=1 // pred_region
      %s25 = smul.u32 0, 8
      %s26 = sld [smem:[#allocation5 + %s25]]
      %s27 = scalar_lea.vmem %s1, %s26
      %p29 = scmp.lt.u32.totalorder 1, 8
      %p30 = pneg %p29
      // Predicated region
      $region14: #{tpu_custom_call.1} parent=12 // pred_check
        _
      $region15: #{tpu_custom_call.1} parent=12 // pred_check_branch
        %32 = sbr.rel (%p29) target = $region17
      $region16: #{tpu_custom_call.1} parent=12 // pred_region
        %s47 = sand.u32 1, 7
        %p48 = scmp.eq.s32.totalorder %s47, 0
        %p49 = pneg %p48
        // Predicated region
        $region29: #{tpu_custom_call.1} parent=16 // pred_check
          _
        $region30: #{tpu_custom_call.1} parent=16 // pred_check_branch
          %51 = sbr.rel (%p48) target = $region32
        $region31: #{tpu_custom_call.1} parent=16 // pred_region
          %s52 = sand.u32 1, 7
          %s53 = ssub.s32 1, %s52
          %s54 = scalar_lea.vmem %s27, %s53
          %s55 = ssub.s32 1, %s52
          %s56 = scalar_lea.vmem [#allocation2], %s55
          %s57 = sshllo.u32 0, %s52
          loop: start=0, step=1, limit=1
          $region33: #{tpu_custom_call.1} parent=31 // loop_pre_header
            _
          $region34: #{tpu_custom_call.1} parent=31 // loop_header
            %s59 = sphi 0, %s63
            %p60 = scmp.ge.s32.totalorder %s59, 1
            %s64 = sphi %s54, %s54
            %s65 = sphi %s56, %s56
          $region35: #{tpu_custom_call.1} parent=31 // loop_header_branch
            %62 = sbr.rel (%p60) target = $region39
          $region36: #{tpu_custom_call.1} parent=31 // loop_body
            %v66 = vld [vmem:[%s64] sm:%s57]
            %67 = vst [vmem:[%s65] sm:%s57] %v66
          $region37: #{tpu_custom_call.1} parent=31 // loop_footer
            %s63 = sadd.s32 1, %s59
          $region38: #{tpu_custom_call.1} parent=31 // loop_footer_branch
            %58 = sbr.rel target = $region34
          $region39: #{tpu_custom_call.1} parent=31 // loop_exit
            _
        $region32: #{tpu_custom_call.1} parent=16 // pred_fallthru
          _
      $region17: #{tpu_custom_call.1} parent=12 // pred_fallthru
        _
      // Predicated region
      $region18: #{tpu_custom_call.1} parent=12 // pred_check
        %p33 = pneg %p29
      $region19: #{tpu_custom_call.1} parent=12 // pred_check_branch
        %35 = sbr.rel (%p33) target = $region21
      $region20: #{tpu_custom_call.1} parent=12 // pred_region
        %s36 = sshllo.u32 0, 1
        loop: start=0, step=1, limit=1
        $region22: #{tpu_custom_call.1} parent=20 // loop_pre_header
          _
        $region23: #{tpu_custom_call.1} parent=20 // loop_header
          %s38 = sphi 0, %s42
          %p39 = scmp.ge.s32.totalorder %s38, 1
          %s43 = sphi %s27, %s27
          %s44 = sphi [#allocation2], [#allocation2]
        $region24: #{tpu_custom_call.1} parent=20 // loop_header_branch
          %41 = sbr.rel (%p39) target = $region28
        $region25: #{tpu_custom_call.1} parent=20 // loop_body
          %v45 = vld [vmem:[%s43] sm:%s36]
          %46 = vst [vmem:[%s44] sm:%s36] %v45
        $region26: #{tpu_custom_call.1} parent=20 // loop_footer
          %s42 = sadd.s32 1, %s38
        $region27: #{tpu_custom_call.1} parent=20 // loop_footer_branch
          %37 = sbr.rel target = $region23
        $region28: #{tpu_custom_call.1} parent=20 // loop_exit
          _
      $region21: #{tpu_custom_call.1} parent=12 // pred_fallthru
        _
      // Predicated region
      $region40: #{tpu_custom_call.1} parent=12 // pred_check
        _
      $region41: #{tpu_custom_call.1} parent=12 // pred_check_branch
        %70 = sbr.rel (0) target = $region43
      $region42: #{tpu_custom_call.1} parent=12 // pred_region
        %71 = vsyncadd [#allocation3], 16
      $region43: #{tpu_custom_call.1} parent=12 // pred_fallthru
        _
      %s72 = sadd.s32 %s25, 1
      %s73 = sld [smem:[#allocation5 + %s72]]
      %s74 = scalar_lea.vmem %s1, %s73
      %s75 = scalar_lea.vmem [#allocation2], 1
      %s76 = scalar_lea.sflag [#allocation3], 1
      %p78 = scmp.lt.u32.totalorder 1, 8
      %p79 = pneg %p78
      // Predicated region
      $region44: #{tpu_custom_call.1} parent=12 // pred_check
        _
      $region45: #{tpu_custom_call.1} parent=12 // pred_check_branch
        %81 = sbr.rel (%p78) target = $region47
      $region46: #{tpu_custom_call.1} parent=12 // pred_region
        %s96 = sand.u32 1, 7
        %p97 = scmp.eq.s32.totalorder %s96, 0
        %p98 = pneg %p97
        // Predicated region
        $region59: #{tpu_custom_call.1} parent=46 // pred_check
          _
        $region60: #{tpu_custom_call.1} parent=46 // pred_check_branch
          %100 = sbr.rel (%p97) target = $region62
        $region61: #{tpu_custom_call.1} parent=46 // pred_region
          %s101 = sand.u32 1, 7
          %s102 = ssub.s32 1, %s101
          %s103 = scalar_lea.vmem %s74, %s102
          %s104 = ssub.s32 1, %s101
          %s105 = scalar_lea.vmem %s75, %s104 [#allocation2]
          %s106 = sshllo.u32 0, %s101
          loop: start=0, step=1, limit=1
          $region63: #{tpu_custom_call.1} parent=61 // loop_pre_header
            _
          $region64: #{tpu_custom_call.1} parent=61 // loop_header
            %s108 = sphi 0, %s112
            %p109 = scmp.ge.s32.totalorder %s108, 1
            %s113 = sphi %s103, %s103
            %s114 = sphi %s105, %s105
          $region65: #{tpu_custom_call.1} parent=61 // loop_header_branch
            %111 = sbr.rel (%p109) target = $region69
          $region66: #{tpu_custom_call.1} parent=61 // loop_body
            %v115 = vld [vmem:[%s113] sm:%s106]
            %116 = vst [vmem:[%s114] sm:%s106] %v115
          $region67: #{tpu_custom_call.1} parent=61 // loop_footer
            %s112 = sadd.s32 1, %s108
          $region68: #{tpu_custom_call.1} parent=61 // loop_footer_branch
            %107 = sbr.rel target = $region64
          $region69: #{tpu_custom_call.1} parent=61 // loop_exit
            _
        $region62: #{tpu_custom_call.1} parent=46 // pred_fallthru
          _
      $region47: #{tpu_custom_call.1} parent=12 // pred_fallthru
        _
      // Predicated region
      $region48: #{tpu_custom_call.1} parent=12 // pred_check
        %p82 = pneg %p78
      $region49: #{tpu_custom_call.1} parent=12 // pred_check_branch
        %84 = sbr.rel (%p82) target = $region51
      $region50: #{tpu_custom_call.1} parent=12 // pred_region
        %s85 = sshllo.u32 0, 1
        loop: start=0, step=1, limit=1
        $region52: #{tpu_custom_call.1} parent=50 // loop_pre_header
          _
        $region53: #{tpu_custom_call.1} parent=50 // loop_header
          %s87 = sphi 0, %s91
          %p88 = scmp.ge.s32.totalorder %s87, 1
          %s92 = sphi %s74, %s74
          %s93 = sphi %s75, %s75
        $region54: #{tpu_custom_call.1} parent=50 // loop_header_branch
          %90 = sbr.rel (%p88) target = $region58
        $region55: #{tpu_custom_call.1} parent=50 // loop_body
          %v94 = vld [vmem:[%s92] sm:%s85]
          %95 = vst [vmem:[%s93] sm:%s85] %v94
        $region56: #{tpu_custom_call.1} parent=50 // loop_footer
          %s91 = sadd.s32 1, %s87
        $region57: #{tpu_custom_call.1} parent=50 // loop_footer_branch
          %86 = sbr.rel target = $region53
        $region58: #{tpu_custom_call.1} parent=50 // loop_exit
          _
      $region51: #{tpu_custom_call.1} parent=12 // pred_fallthru
        _
      // Predicated region
      $region70: #{tpu_custom_call.1} parent=12 // pred_check
        _
      $region71: #{tpu_custom_call.1} parent=12 // pred_check_branch
        %119 = sbr.rel (0) target = $region73
      $region72: #{tpu_custom_call.1} parent=12 // pred_region
        %120 = vsyncadd %s76, 16
      $region73: #{tpu_custom_call.1} parent=12 // pred_fallthru
        _
      %s121 = sadd.s32 %s25, 2
      %s122 = sld [smem:[#allocation5 + %s121]]
      %s123 = scalar_lea.vmem %s1, %s122
      %s124 = scalar_lea.vmem [#allocation2], 2
      %s125 = scalar_lea.sflag [#allocation3], 2
      %p127 = scmp.lt.u32.totalorder 1, 8
      %p128 = pneg %p127
      // Predicated region
      $region74: #{tpu_custom_call.1} parent=12 // pred_check
        _
      $region75: #{tpu_custom_call.1} parent=12 // pred_check_branch
        %130 = sbr.rel (%p127) target = $region77
      $region76: #{tpu_custom_call.1} parent=12 // pred_region
        %s145 = sand.u32 1, 7
        %p146 = scmp.eq.s32.totalorder %s145, 0
        %p147 = pneg %p146
        // Predicated region
        $region89: #{tpu_custom_call.1} parent=76 // pred_check
          _
        $region90: #{tpu_custom_call.1} parent=76 // pred_check_branch
          %149 = sbr.rel (%p146) target = $region92
        $region91: #{tpu_custom_call.1} parent=76 // pred_region
          %s150 = sand.u32 1, 7
          %s151 = ssub.s32 1, %s150
          %s152 = scalar_lea.vmem %s123, %s151
          %s153 = ssub.s32 1, %s150
          %s154 = scalar_lea.vmem %s124, %s153 [#allocation2]
          %s155 = sshllo.u32 0, %s150
          loop: start=0, step=1, limit=1
          $region93: #{tpu_custom_call.1} parent=91 // loop_pre_header
            _
          $region94: #{tpu_custom_call.1} parent=91 // loop_header
            %s157 = sphi 0, %s161
            %p158 = scmp.ge.s32.totalorder %s157, 1
            %s162 = sphi %s152, %s152
            %s163 = sphi %s154, %s154
          $region95: #{tpu_custom_call.1} parent=91 // loop_header_branch
            %160 = sbr.rel (%p158) target = $region99
          $region96: #{tpu_custom_call.1} parent=91 // loop_body
            %v164 = vld [vmem:[%s162] sm:%s155]
            %165 = vst [vmem:[%s163] sm:%s155] %v164
          $region97: #{tpu_custom_call.1} parent=91 // loop_footer
            %s161 = sadd.s32 1, %s157
          $region98: #{tpu_custom_call.1} parent=91 // loop_footer_branch
            %156 = sbr.rel target = $region94
          $region99: #{tpu_custom_call.1} parent=91 // loop_exit
            _
        $region92: #{tpu_custom_call.1} parent=76 // pred_fallthru
          _
      $region77: #{tpu_custom_call.1} parent=12 // pred_fallthru
        _
      // Predicated region
      $region78: #{tpu_custom_call.1} parent=12 // pred_check
        %p131 = pneg %p127
      $region79: #{tpu_custom_call.1} parent=12 // pred_check_branch
        %133 = sbr.rel (%p131) target = $region81
      $region80: #{tpu_custom_call.1} parent=12 // pred_region
        %s134 = sshllo.u32 0, 1
        loop: start=0, step=1, limit=1
        $region82: #{tpu_custom_call.1} parent=80 // loop_pre_header
          _
        $region83: #{tpu_custom_call.1} parent=80 // loop_header
          %s136 = sphi 0, %s140
          %p137 = scmp.ge.s32.totalorder %s136, 1
          %s141 = sphi %s123, %s123
          %s142 = sphi %s124, %s124
        $region84: #{tpu_custom_call.1} parent=80 // loop_header_branch
          %139 = sbr.rel (%p137) target = $region88
        $region85: #{tpu_custom_call.1} parent=80 // loop_body
          %v143 = vld [vmem:[%s141] sm:%s134]
          %144 = vst [vmem:[%s142] sm:%s134] %v143
        $region86: #{tpu_custom_call.1} parent=80 // loop_footer
          %s140 = sadd.s32 1, %s136
        $region87: #{tpu_custom_call.1} parent=80 // loop_footer_branch
          %135 = sbr.rel target = $region83
        $region88: #{tpu_custom_call.1} parent=80 // loop_exit
          _
      $region81: #{tpu_custom_call.1} parent=12 // pred_fallthru
        _
      // Predicated region
      $region100: #{tpu_custom_call.1} parent=12 // pred_check
        _
      $region101: #{tpu_custom_call.1} parent=12 // pred_check_branch
        %168 = sbr.rel (0) target = $region103
      $region102: #{tpu_custom_call.1} parent=12 // pred_region
        %169 = vsyncadd %s125, 16
      $region103: #{tpu_custom_call.1} parent=12 // pred_fallthru
        _
      %s170 = sadd.s32 %s25, 3
      %s171 = sld [smem:[#allocation5 + %s170]]
      %s172 = scalar_lea.vmem %s1, %s171
      %s173 = scalar_lea.vmem [#allocation2], 3
      %s174 = scalar_lea.sflag [#allocation3], 3
      %p176 = scmp.lt.u32.totalorder 1, 8
      %p177 = pneg %p176
      // Predicated region
      $region104: #{tpu_custom_call.1} parent=12 // pred_check
        _
      $region105: #{tpu_custom_call.1} parent=12 // pred_check_branch
        %179 = sbr.rel (%p176) target = $region107
      $region106: #{tpu_custom_call.1} parent=12 // pred_region
        %s194 = sand.u32 1, 7
        %p195 = scmp.eq.s32.totalorder %s194, 0
        %p196 = pneg %p195
        // Predicated region
        $region119: #{tpu_custom_call.1} parent=106 // pred_check
          _
        $region120: #{tpu_custom_call.1} parent=106 // pred_check_branch
          %198 = sbr.rel (%p195) target = $region122
        $region121: #{tpu_custom_call.1} parent=106 // pred_region
          %s199 = sand.u32 1, 7
          %s200 = ssub.s32 1, %s199
          %s201 = scalar_lea.vmem %s172, %s200
          %s202 = ssub.s32 1, %s199
          %s203 = scalar_lea.vmem %s173, %s202 [#allocation2]
          %s204 = sshllo.u32 0, %s199
          loop: start=0, step=1, limit=1
          $region123: #{tpu_custom_call.1} parent=121 // loop_pre_header
            _
          $region124: #{tpu_custom_call.1} parent=121 // loop_header
            %s206 = sphi 0, %s210
            %p207 = scmp.ge.s32.totalorder %s206, 1
            %s211 = sphi %s201, %s201
            %s212 = sphi %s203, %s203
          $region125: #{tpu_custom_call.1} parent=121 // loop_header_branch
            %209 = sbr.rel (%p207) target = $region129
          $region126: #{tpu_custom_call.1} parent=121 // loop_body
            %v213 = vld [vmem:[%s211] sm:%s204]
            %214 = vst [vmem:[%s212] sm:%s204] %v213
          $region127: #{tpu_custom_call.1} parent=121 // loop_footer
            %s210 = sadd.s32 1, %s206
          $region128: #{tpu_custom_call.1} parent=121 // loop_footer_branch
            %205 = sbr.rel target = $region124
          $region129: #{tpu_custom_call.1} parent=121 // loop_exit
            _
        $region122: #{tpu_custom_call.1} parent=106 // pred_fallthru
          _
      $region107: #{tpu_custom_call.1} parent=12 // pred_fallthru
        _
      // Predicated region
      $region108: #{tpu_custom_call.1} parent=12 // pred_check
        %p180 = pneg %p176
      $region109: #{tpu_custom_call.1} parent=12 // pred_check_branch
        %182 = sbr.rel (%p180) target = $region111
      $region110: #{tpu_custom_call.1} parent=12 // pred_region
        %s183 = sshllo.u32 0, 1
        loop: start=0, step=1, limit=1
        $region112: #{tpu_custom_call.1} parent=110 // loop_pre_header
          _
        $region113: #{tpu_custom_call.1} parent=110 // loop_header
          %s185 = sphi 0, %s189
          %p186 = scmp.ge.s32.totalorder %s185, 1
          %s190 = sphi %s172, %s172
          %s191 = sphi %s173, %s173
        $region114: #{tpu_custom_call.1} parent=110 // loop_header_branch
          %188 = sbr.rel (%p186) target = $region118
        $region115: #{tpu_custom_call.1} parent=110 // loop_body
          %v192 = vld [vmem:[%s190] sm:%s183]
          %193 = vst [vmem:[%s191] sm:%s183] %v192
        $region116: #{tpu_custom_call.1} parent=110 // loop_footer
          %s189 = sadd.s32 1, %s185
        $region117: #{tpu_custom_call.1} parent=110 // loop_footer_branch
          %184 = sbr.rel target = $region113
        $region118: #{tpu_custom_call.1} parent=110 // loop_exit
          _
      $region111: #{tpu_custom_call.1} parent=12 // pred_fallthru
        _
      // Predicated region
      $region130: #{tpu_custom_call.1} parent=12 // pred_check
        _
      $region131: #{tpu_custom_call.1} parent=12 // pred_check_branch
        %217 = sbr.rel (0) target = $region133
      $region132: #{tpu_custom_call.1} parent=12 // pred_region
        %218 = vsyncadd %s174, 16
      $region133: #{tpu_custom_call.1} parent=12 // pred_fallthru
        _
      %s219 = sadd.s32 %s25, 4
      %s220 = sld [smem:[#allocation5 + %s219]]
      %s221 = scalar_lea.vmem %s1, %s220
      %s222 = scalar_lea.vmem [#allocation2], 4
      %s223 = scalar_lea.sflag [#allocation3], 4
      %p225 = scmp.lt.u32.totalorder 1, 8
      %p226 = pneg %p225
      // Predicated region
      $region134: #{tpu_custom_call.1} parent=12 // pred_check
        _
      $region135: #{tpu_custom_call.1} parent=12 // pred_check_branch
        %228 = sbr.rel (%p225) target = $region137
      $region136: #{tpu_custom_call.1} parent=12 // pred_region
        %s243 = sand.u32 1, 7
        %p244 = scmp.eq.s32.totalorder %s243, 0
        %p245 = pneg %p244
        // Predicated region
        $region149: #{tpu_custom_call.1} parent=136 // pred_check
          _
        $region150: #{tpu_custom_call.1} parent=136 // pred_check_branch
          %247 = sbr.rel (%p244) target = $region152
        $region151: #{tpu_custom_call.1} parent=136 // pred_region
          %s248 = sand.u32 1, 7
          %s249 = ssub.s32 1, %s248
          %s250 = scalar_lea.vmem %s221, %s249
          %s251 = ssub.s32 1, %s248
          %s252 = scalar_lea.vmem %s222, %s251 [#allocation2]
          %s253 = sshllo.u32 0, %s248
          loop: start=0, step=1, limit=1
          $region153: #{tpu_custom_call.1} parent=151 // loop_pre_header
            _
          $region154: #{tpu_custom_call.1} parent=151 // loop_header
            %s255 = sphi 0, %s259
            %p256 = scmp.ge.s32.totalorder %s255, 1
            %s260 = sphi %s250, %s250
            %s261 = sphi %s252, %s252
          $region155: #{tpu_custom_call.1} parent=151 // loop_header_branch
            %258 = sbr.rel (%p256) target = $region159
          $region156: #{tpu_custom_call.1} parent=151 // loop_body
            %v262 = vld [vmem:[%s260] sm:%s253]
            %263 = vst [vmem:[%s261] sm:%s253] %v262
          $region157: #{tpu_custom_call.1} parent=151 // loop_footer
            %s259 = sadd.s32 1, %s255
          $region158: #{tpu_custom_call.1} parent=151 // loop_footer_branch
            %254 = sbr.rel target = $region154
          $region159: #{tpu_custom_call.1} parent=151 // loop_exit
            _
        $region152: #{tpu_custom_call.1} parent=136 // pred_fallthru
          _
      $region137: #{tpu_custom_call.1} parent=12 // pred_fallthru
        _
      // Predicated region
      $region138: #{tpu_custom_call.1} parent=12 // pred_check
        %p229 = pneg %p225
      $region139: #{tpu_custom_call.1} parent=12 // pred_check_branch
        %231 = sbr.rel (%p229) target = $region141
      $region140: #{tpu_custom_call.1} parent=12 // pred_region
        %s232 = sshllo.u32 0, 1
        loop: start=0, step=1, limit=1
        $region142: #{tpu_custom_call.1} parent=140 // loop_pre_header
          _
        $region143: #{tpu_custom_call.1} parent=140 // loop_header
          %s234 = sphi 0, %s238
          %p235 = scmp.ge.s32.totalorder %s234, 1
          %s239 = sphi %s221, %s221
          %s240 = sphi %s222, %s222
        $region144: #{tpu_custom_call.1} parent=140 // loop_header_branch
          %237 = sbr.rel (%p235) target = $region148
        $region145: #{tpu_custom_call.1} parent=140 // loop_body
          %v241 = vld [vmem:[%s239] sm:%s232]
          %242 = vst [vmem:[%s240] sm:%s232] %v241
        $region146: #{tpu_custom_call.1} parent=140 // loop_footer
          %s238 = sadd.s32 1, %s234
        $region147: #{tpu_custom_call.1} parent=140 // loop_footer_branch
          %233 = sbr.rel target = $region143
        $region148: #{tpu_custom_call.1} parent=140 // loop_exit
          _
      $region141: #{tpu_custom_call.1} parent=12 // pred_fallthru
        _
      // Predicated region
      $region160: #{tpu_custom_call.1} parent=12 // pred_check
        _
      $region161: #{tpu_custom_call.1} parent=12 // pred_check_branch
        %266 = sbr.rel (0) target = $region163
      $region162: #{tpu_custom_call.1} parent=12 // pred_region
        %267 = vsyncadd %s223, 16
      $region163: #{tpu_custom_call.1} parent=12 // pred_fallthru
        _
      %s268 = sadd.s32 %s25, 5
      %s269 = sld [smem:[#allocation5 + %s268]]
      %s270 = scalar_lea.vmem %s1, %s269
      %s271 = scalar_lea.vmem [#allocation2], 5
      %s272 = scalar_lea.sflag [#allocation3], 5
      %p274 = scmp.lt.u32.totalorder 1, 8
      %p275 = pneg %p274
      // Predicated region
      $region164: #{tpu_custom_call.1} parent=12 // pred_check
        _
      $region165: #{tpu_custom_call.1} parent=12 // pred_check_branch
        %277 = sbr.rel (%p274) target = $region167
      $region166: #{tpu_custom_call.1} parent=12 // pred_region
        %s292 = sand.u32 1, 7
        %p293 = scmp.eq.s32.totalorder %s292, 0
        %p294 = pneg %p293
        // Predicated region
        $region179: #{tpu_custom_call.1} parent=166 // pred_check
          _
        $region180: #{tpu_custom_call.1} parent=166 // pred_check_branch
          %296 = sbr.rel (%p293) target = $region182
        $region181: #{tpu_custom_call.1} parent=166 // pred_region
          %s297 = sand.u32 1, 7
          %s298 = ssub.s32 1, %s297
          %s299 = scalar_lea.vmem %s270, %s298
          %s300 = ssub.s32 1, %s297
          %s301 = scalar_lea.vmem %s271, %s300 [#allocation2]
          %s302 = sshllo.u32 0, %s297
          loop: start=0, step=1, limit=1
          $region183: #{tpu_custom_call.1} parent=181 // loop_pre_header
            _
          $region184: #{tpu_custom_call.1} parent=181 // loop_header
            %s304 = sphi 0, %s308
            %p305 = scmp.ge.s32.totalorder %s304, 1
            %s309 = sphi %s299, %s299
            %s310 = sphi %s301, %s301
          $region185: #{tpu_custom_call.1} parent=181 // loop_header_branch
            %307 = sbr.rel (%p305) target = $region189
          $region186: #{tpu_custom_call.1} parent=181 // loop_body
            %v311 = vld [vmem:[%s309] sm:%s302]
            %312 = vst [vmem:[%s310] sm:%s302] %v311
          $region187: #{tpu_custom_call.1} parent=181 // loop_footer
            %s308 = sadd.s32 1, %s304
          $region188: #{tpu_custom_call.1} parent=181 // loop_footer_branch
            %303 = sbr.rel target = $region184
          $region189: #{tpu_custom_call.1} parent=181 // loop_exit
            _
        $region182: #{tpu_custom_call.1} parent=166 // pred_fallthru
          _
      $region167: #{tpu_custom_call.1} parent=12 // pred_fallthru
        _
      // Predicated region
      $region168: #{tpu_custom_call.1} parent=12 // pred_check
        %p278 = pneg %p274
      $region169: #{tpu_custom_call.1} parent=12 // pred_check_branch
        %280 = sbr.rel (%p278) target = $region171
      $region170: #{tpu_custom_call.1} parent=12 // pred_region
        %s281 = sshllo.u32 0, 1
        loop: start=0, step=1, limit=1
        $region172: #{tpu_custom_call.1} parent=170 // loop_pre_header
          _
        $region173: #{tpu_custom_call.1} parent=170 // loop_header
          %s283 = sphi 0, %s287
          %p284 = scmp.ge.s32.totalorder %s283, 1
          %s288 = sphi %s270, %s270
          %s289 = sphi %s271, %s271
        $region174: #{tpu_custom_call.1} parent=170 // loop_header_branch
          %286 = sbr.rel (%p284) target = $region178
        $region175: #{tpu_custom_call.1} parent=170 // loop_body
          %v290 = vld [vmem:[%s288] sm:%s281]
          %291 = vst [vmem:[%s289] sm:%s281] %v290
        $region176: #{tpu_custom_call.1} parent=170 // loop_footer
          %s287 = sadd.s32 1, %s283
        $region177: #{tpu_custom_call.1} parent=170 // loop_footer_branch
          %282 = sbr.rel target = $region173
        $region178: #{tpu_custom_call.1} parent=170 // loop_exit
          _
      $region171: #{tpu_custom_call.1} parent=12 // pred_fallthru
        _
      // Predicated region
      $region190: #{tpu_custom_call.1} parent=12 // pred_check
        _
      $region191: #{tpu_custom_call.1} parent=12 // pred_check_branch
        %315 = sbr.rel (0) target = $region193
      $region192: #{tpu_custom_call.1} parent=12 // pred_region
        %316 = vsyncadd %s272, 16
      $region193: #{tpu_custom_call.1} parent=12 // pred_fallthru
        _
      %s317 = sadd.s32 %s25, 6
      %s318 = sld [smem:[#allocation5 + %s317]]
      %s319 = scalar_lea.vmem %s1, %s318
      %s320 = scalar_lea.vmem [#allocation2], 6
      %s321 = scalar_lea.sflag [#allocation3], 6
      %p323 = scmp.lt.u32.totalorder 1, 8
      %p324 = pneg %p323
      // Predicated region
      $region194: #{tpu_custom_call.1} parent=12 // pred_check
        _
      $region195: #{tpu_custom_call.1} parent=12 // pred_check_branch
        %326 = sbr.rel (%p323) target = $region197
      $region196: #{tpu_custom_call.1} parent=12 // pred_region
        %s341 = sand.u32 1, 7
        %p342 = scmp.eq.s32.totalorder %s341, 0
        %p343 = pneg %p342
        // Predicated region
        $region209: #{tpu_custom_call.1} parent=196 // pred_check
          _
        $region210: #{tpu_custom_call.1} parent=196 // pred_check_branch
          %345 = sbr.rel (%p342) target = $region212
        $region211: #{tpu_custom_call.1} parent=196 // pred_region
          %s346 = sand.u32 1, 7
          %s347 = ssub.s32 1, %s346
          %s348 = scalar_lea.vmem %s319, %s347
          %s349 = ssub.s32 1, %s346
          %s350 = scalar_lea.vmem %s320, %s349 [#allocation2]
          %s351 = sshllo.u32 0, %s346
          loop: start=0, step=1, limit=1
          $region213: #{tpu_custom_call.1} parent=211 // loop_pre_header
            _
          $region214: #{tpu_custom_call.1} parent=211 // loop_header
            %s353 = sphi 0, %s357
            %p354 = scmp.ge.s32.totalorder %s353, 1
            %s358 = sphi %s348, %s348
            %s359 = sphi %s350, %s350
          $region215: #{tpu_custom_call.1} parent=211 // loop_header_branch
            %356 = sbr.rel (%p354) target = $region219
          $region216: #{tpu_custom_call.1} parent=211 // loop_body
            %v360 = vld [vmem:[%s358] sm:%s351]
            %361 = vst [vmem:[%s359] sm:%s351] %v360
          $region217: #{tpu_custom_call.1} parent=211 // loop_footer
            %s357 = sadd.s32 1, %s353
          $region218: #{tpu_custom_call.1} parent=211 // loop_footer_branch
            %352 = sbr.rel target = $region214
          $region219: #{tpu_custom_call.1} parent=211 // loop_exit
            _
        $region212: #{tpu_custom_call.1} parent=196 // pred_fallthru
          _
      $region197: #{tpu_custom_call.1} parent=12 // pred_fallthru
        _
      // Predicated region
      $region198: #{tpu_custom_call.1} parent=12 // pred_check
        %p327 = pneg %p323
      $region199: #{tpu_custom_call.1} parent=12 // pred_check_branch
        %329 = sbr.rel (%p327) target = $region201
      $region200: #{tpu_custom_call.1} parent=12 // pred_region
        %s330 = sshllo.u32 0, 1
        loop: start=0, step=1, limit=1
        $region202: #{tpu_custom_call.1} parent=200 // loop_pre_header
          _
        $region203: #{tpu_custom_call.1} parent=200 // loop_header
          %s332 = sphi 0, %s336
          %p333 = scmp.ge.s32.totalorder %s332, 1
          %s337 = sphi %s319, %s319
          %s338 = sphi %s320, %s320
        $region204: #{tpu_custom_call.1} parent=200 // loop_header_branch
          %335 = sbr.rel (%p333) target = $region208
        $region205: #{tpu_custom_call.1} parent=200 // loop_body
          %v339 = vld [vmem:[%s337] sm:%s330]
          %340 = vst [vmem:[%s338] sm:%s330] %v339
        $region206: #{tpu_custom_call.1} parent=200 // loop_footer
          %s336 = sadd.s32 1, %s332
        $region207: #{tpu_custom_call.1} parent=200 // loop_footer_branch
          %331 = sbr.rel target = $region203
        $region208: #{tpu_custom_call.1} parent=200 // loop_exit
          _
      $region201: #{tpu_custom_call.1} parent=12 // pred_fallthru
        _
      // Predicated region
      $region220: #{tpu_custom_call.1} parent=12 // pred_check
        _
      $region221: #{tpu_custom_call.1} parent=12 // pred_check_branch
        %364 = sbr.rel (0) target = $region223
      $region222: #{tpu_custom_call.1} parent=12 // pred_region
        %365 = vsyncadd %s321, 16
      $region223: #{tpu_custom_call.1} parent=12 // pred_fallthru
        _
      %s366 = sadd.s32 %s25, 7
      %s367 = sld [smem:[#allocation5 + %s366]]
      %s368 = scalar_lea.vmem %s1, %s367
      %s369 = scalar_lea.vmem [#allocation2], 7
      %s370 = scalar_lea.sflag [#allocation3], 7
      %p372 = scmp.lt.u32.totalorder 1, 8
      %p373 = pneg %p372
      // Predicated region
      $region224: #{tpu_custom_call.1} parent=12 // pred_check
        _
      $region225: #{tpu_custom_call.1} parent=12 // pred_check_branch
        %375 = sbr.rel (%p372) target = $region227
      $region226: #{tpu_custom_call.1} parent=12 // pred_region
        %s390 = sand.u32 1, 7
        %p391 = scmp.eq.s32.totalorder %s390, 0
        %p392 = pneg %p391
        // Predicated region
        $region239: #{tpu_custom_call.1} parent=226 // pred_check
          _
        $region240: #{tpu_custom_call.1} parent=226 // pred_check_branch
          %394 = sbr.rel (%p391) target = $region242
        $region241: #{tpu_custom_call.1} parent=226 // pred_region
          %s395 = sand.u32 1, 7
          %s396 = ssub.s32 1, %s395
          %s397 = scalar_lea.vmem %s368, %s396
          %s398 = ssub.s32 1, %s395
          %s399 = scalar_lea.vmem %s369, %s398 [#allocation2]
          %s400 = sshllo.u32 0, %s395
          loop: start=0, step=1, limit=1
          $region243: #{tpu_custom_call.1} parent=241 // loop_pre_header
            _
          $region244: #{tpu_custom_call.1} parent=241 // loop_header
            %s402 = sphi 0, %s406
            %p403 = scmp.ge.s32.totalorder %s402, 1
            %s407 = sphi %s397, %s397
            %s408 = sphi %s399, %s399
          $region245: #{tpu_custom_call.1} parent=241 // loop_header_branch
            %405 = sbr.rel (%p403) target = $region249
          $region246: #{tpu_custom_call.1} parent=241 // loop_body
            %v409 = vld [vmem:[%s407] sm:%s400]
            %410 = vst [vmem:[%s408] sm:%s400] %v409
          $region247: #{tpu_custom_call.1} parent=241 // loop_footer
            %s406 = sadd.s32 1, %s402
          $region248: #{tpu_custom_call.1} parent=241 // loop_footer_branch
            %401 = sbr.rel target = $region244
          $region249: #{tpu_custom_call.1} parent=241 // loop_exit
            _
        $region242: #{tpu_custom_call.1} parent=226 // pred_fallthru
          _
      $region227: #{tpu_custom_call.1} parent=12 // pred_fallthru
        _
      // Predicated region
      $region228: #{tpu_custom_call.1} parent=12 // pred_check
        %p376 = pneg %p372
      $region229: #{tpu_custom_call.1} parent=12 // pred_check_branch
        %378 = sbr.rel (%p376) target = $region231
      $region230: #{tpu_custom_call.1} parent=12 // pred_region
        %s379 = sshllo.u32 0, 1
        loop: start=0, step=1, limit=1
        $region232: #{tpu_custom_call.1} parent=230 // loop_pre_header
          _
        $region233: #{tpu_custom_call.1} parent=230 // loop_header
          %s381 = sphi 0, %s385
          %p382 = scmp.ge.s32.totalorder %s381, 1
          %s386 = sphi %s368, %s368
          %s387 = sphi %s369, %s369
        $region234: #{tpu_custom_call.1} parent=230 // loop_header_branch
          %384 = sbr.rel (%p382) target = $region238
        $region235: #{tpu_custom_call.1} parent=230 // loop_body
          %v388 = vld [vmem:[%s386] sm:%s379]
          %389 = vst [vmem:[%s387] sm:%s379] %v388
        $region236: #{tpu_custom_call.1} parent=230 // loop_footer
          %s385 = sadd.s32 1, %s381
        $region237: #{tpu_custom_call.1} parent=230 // loop_footer_branch
          %380 = sbr.rel target = $region233
        $region238: #{tpu_custom_call.1} parent=230 // loop_exit
          _
      $region231: #{tpu_custom_call.1} parent=12 // pred_fallthru
        _
      // Predicated region
      $region250: #{tpu_custom_call.1} parent=12 // pred_check
        _
      $region251: #{tpu_custom_call.1} parent=12 // pred_check_branch
        %413 = sbr.rel (0) target = $region253
      $region252: #{tpu_custom_call.1} parent=12 // pred_region
        %414 = vsyncadd %s370, 16
      $region253: #{tpu_custom_call.1} parent=12 // pred_fallthru
        _
      %s415 = smul.u32 1, 1
      %s416 = sshll.u32 %s415, 4
      %417 = dma.done [#allocation3], %s416
      %s418 = sshll.u32 %s415, 4
      %419 = dma.done %s76, %s418
      %s420 = sshll.u32 %s415, 4
      %421 = dma.done %s125, %s420
      %s422 = sshll.u32 %s415, 4
      %423 = dma.done %s174, %s422
      %s424 = sshll.u32 %s415, 4
      %425 = dma.done %s223, %s424
      %s426 = sshll.u32 %s415, 4
      %427 = dma.done %s272, %s426
      %s428 = sshll.u32 %s415, 4
      %429 = dma.done %s321, %s428
      %s430 = sshll.u32 %s415, 4
      %431 = dma.done %s370, %s430
    $region13: #{tpu_custom_call.1} parent=1 // pred_fallthru
      _
    %v432 = vld [vmem:[#allocation2] sm:$0xff]
    %v433 = vpack.c.bf16 %v432, %v432
    %v434 = vld [vmem:[%s2] sm:$0xf]
    %v435 = vld [vmem:[%s2 + $0x4] sm:$0xf]
    %v436 = vld [vmem:[%s2 + $0x8] sm:$0xf]
    %v437 = vld [vmem:[%s2 + $0xc] sm:$0xf]
    %v438 = vld [vmem:[%s3] sm:$0x1]
    %v440 = vlaneseq
    %v441 = vshrl.u32 %v440, 7
    %v442 = vsub.s32 0, %v441
    %v443 = vrot.slane %v438, %v442
    %v449 = vunpack.c.l.b16 %v434
    %v450 = vunpack.c.l.b16 %v435
    %v451 = vunpack.c.l.b16 %v436
    %v452 = vunpack.c.l.b16 %v437
    %v453 = vpack.c.b16 %v450, %v449
    %v454 = vpack.c.b16 %v452, %v451
    %vm457 = vcmask 261120
    %v459 = vsel %vm457, %v433, 0
    %461 = vmatprep.subr.bf16.mxu0 0
    %462 = vmatpush1.bf16.msra.mxu0 %v453
    %463 = vmatprep.subr.bf16.mxu0 0
    %464 = vmatpush1.bf16.msra.mxu0 %v454
    %465 = vmatprep.subr.bf16.mxu0 0
    %466 = vmatpush1.bf16.msra.mxu0 0
    %467 = vmatprep.subr.bf16.mxu0 0
    %468 = vmatpush1.bf16.msra.mxu0 0
    %469 = vmatprep.subr.bf16.mxu0 0
    %470 = vmatpush1.bf16.msra.mxu0 0
    %471 = vmatprep.subr.bf16.mxu0 0
    %472 = vmatpush1.bf16.msra.mxu0 0
    %473 = vmatprep.subr.bf16.mxu0 0
    %474 = vmatpush1.bf16.msra.mxu0 0
    %475 = vmatprep.subr.bf16.mxu0 0
    %476 = vmatpush1.bf16.msra.mxu0 0
    %477 = vmatprep.subr.bf16.mxu0 0
    %478 = vmatpush1.bf16.msra.mxu0 0
    %479 = vmatprep.subr.bf16.mxu0 0
    %480 = vmatpush1.bf16.msra.mxu0 0
    %481 = vmatprep.subr.bf16.mxu0 0
    %482 = vmatpush1.bf16.msra.mxu0 0
    %483 = vmatprep.subr.bf16.mxu0 0
    %484 = vmatpush1.bf16.msra.mxu0 0
    %485 = vmatprep.subr.bf16.mxu0 0
    %486 = vmatpush1.bf16.msra.mxu0 0
    %487 = vmatprep.subr.bf16.mxu0 0
    %488 = vmatpush1.bf16.msra.mxu0 0
    %489 = vmatprep.subr.bf16.mxu0 0
    %490 = vmatpush1.bf16.msra.mxu0 0
    %491 = vmatprep.subr.bf16.mxu0 0
    %492 = vmatpush1.bf16.msra.mxu0 0
    %493 = vmatprep.mubr.bf16.mxu0 0
    %494 = vmatmul.mubr.bf16.gmra.mrb[0].mxu0 %v459
    %v495 = vpop.f32.mrb[0].mxu0
    %v496 = vadd.f32 %v443, %v495
    %v497 = vpop.f32.mrb[0].mxu0
    %v498 = vpop.f32.mrb[0].mxu0
    %v499 = vpop.f32.mrb[0].mxu0
    %500 = vdwg.mxu0
    %v501 = vmul.f32 %v496, 0.5
    %v502 = vmul.f32 %v496, 0.70710677
    %v503 = verf.f32.pop %v502
    %v504 = vadd.f32 %v503, 1.0
    %v505 = vmul.f32 %v501, %v504
    %506 = vst [vmem:[#allocation6] sm:$0xff] %v505
    // Predicated region
    $region254: #{tpu_custom_call.1} parent=1 // pred_check
      _
    $region255: #{tpu_custom_call.1} parent=1 // pred_check_branch
      %508 = sbr.rel (0) target = $region257
    $region256: #{tpu_custom_call.1} parent=1 // pred_region
      %s510 = ssub.s32 128, 128
      %511 = vsyncadd [#allocation7], %s510
      %s513 = sshll.u32 [#allocation6], 4
      %s514 = int_to_ptr.vmem [resolvable:$true] %s513
      %516 = dma.vmem_to_hbm [thread:$0]  %s514, 128, %s4, [#allocation7]
    $region257: #{tpu_custom_call.1} parent=1 // pred_fallthru
      _
    // Predicated region
    $region258: #{tpu_custom_call.1} parent=1 // pred_check
      _
    $region259: #{tpu_custom_call.1} parent=1 // pred_check_branch
      %518 = sbr.rel (0) target = $region261
    $region260: #{tpu_custom_call.1} parent=1 // pred_region
      %519 = dma.done [#allocation7], 128
    $region261: #{tpu_custom_call.1} parent=1 // pred_fallthru
      _
    %520 = vsyncpa [#allocation7], 1
  %521 = vsyncmov [#allocation3]
  %s522 = vpop.sfrf %521
  %p523 = scmp.eq.s32.totalorder %s522, 0
  %p524 = pneg %p523
  %526 = shalt.err (%p524)
  %s527 = scalar_lea.sflag [#allocation3], 1
  %528 = vsyncmov %s527
  %s529 = vpop.sfrf %528
  %p530 = scmp.eq.s32.totalorder %s529, 0
  %p531 = pneg %p530
  %533 = shalt.err (%p531)
  %s534 = scalar_lea.sflag [#allocation3], 2
  %535 = vsyncmov %s534
  %s536 = vpop.sfrf %535
  %p537 = scmp.eq.s32.totalorder %s536, 0
  %p538 = pneg %p537
  %540 = shalt.err (%p538)
  %s541 = scalar_lea.sflag [#allocation3], 3
  %542 = vsyncmov %s541
  %s543 = vpop.sfrf %542
  %p544 = scmp.eq.s32.totalorder %s543, 0
  %p545 = pneg %p544
  %547 = shalt.err (%p545)
  %s548 = scalar_lea.sflag [#allocation3], 4
  %549 = vsyncmov %s548
  %s550 = vpop.sfrf %549
  %p551 = scmp.eq.s32.totalorder %s550, 0
  %p552 = pneg %p551
  %554 = shalt.err (%p552)
  %s555 = scalar_lea.sflag [#allocation3], 5
  %556 = vsyncmov %s555
  %s557 = vpop.sfrf %556
  %p558 = scmp.eq.s32.totalorder %s557, 0
  %p559 = pneg %p558
  %561 = shalt.err (%p559)
  %s562 = scalar_lea.sflag [#allocation3], 6
  %563 = vsyncmov %s562
  %s564 = vpop.sfrf %563
  %p565 = scmp.eq.s32.totalorder %s564, 0
  %p566 = pneg %p565
  %568 = shalt.err (%p566)
  %s569 = scalar_lea.sflag [#allocation3], 7
  %570 = vsyncmov %s569
  %s571 = vpop.sfrf %570
  %p572 = scmp.eq.s32.totalorder %s571, 0
  %p573 = pneg %p572
  %575 = shalt.err (%p573)

</llo_original>
